<compile_context>
chip_gen: v7x
topology: tpu7x:2x2x1
jax: 0.10.0
libtpu: 0.0.40
codegen_flags: <defaults>
</compile_context>

<pallas_src>
import jax
import jax.numpy as jnp
from jax.experimental import pallas as pl
from jax.experimental.pallas import tpu as pltpu


def selection_kernel(x_ref, w1_ref, b1_ref, w2_ref, b2_ref, out_ref):
    """Per grid step:
      x_ref  : [TILE_B, D]  batch tile (storage dtype: f32 or bf16)
      w1_ref : [H, D]       fc1 weight, PyTorch layout (VMEM-resident)
      b1_ref : [H, 1]       fc1 bias (f32)
      w2_ref : [N, H]       fc2 weight, PyTorch layout (VMEM-resident)
      b2_ref : [N, 1]       fc2 bias (f32)
      out_ref: [N, TILE_B]  softmax probabilities, transposed (f32)
    """
    # hT = W1 @ x.T  ("NT" contraction, same form as the flash-attention q@k.T dot):
    # no data transpose, and the MXU result dim is tile_b (a full 128/256-wide lane
    # dimension) instead of 16 columns.  Always accumulate in f32.
    hT = jax.lax.dot_general(
        w1_ref[...], x_ref[...],
        dimension_numbers=(((1,), (1,)), ((), ())),
        preferred_element_type=jnp.float32)
    hT = jnp.maximum(hT + b1_ref[...], 0.0)          # bias + ReLU in f32 (VPU)
    # TODO(synk): Dropout(0.2) is training-only; eval-mode forward is identity.
    hT = hT.astype(w2_ref.dtype)                     # feed 2nd MXU op in storage dtype
    logitsT = jnp.dot(w2_ref[...], hT, preferred_element_type=jnp.float32)
    logitsT = logitsT + b2_ref[...]

    # Numerically stable softmax over the N=8 sublanes, entirely in f32
    # (v5e has no bf16 VPU/EUP paths).  Reductions over 8 sublanes are cheap XLU work.
    m = jnp.max(logitsT, axis=0, keepdims=True)      # [1, tile_b]
    e = jnp.exp(logitsT - m)
    s = jnp.sum(e, axis=0, keepdims=True)
    # Exact division (NOT pl.reciprocal(approx=True)): rows sum to 1 to f32 rounding
    # and there is no approximation error in the comparison against the reference.
    out_ref[...] = (e / s).astype(out_ref.dtype)
    # Note: a ragged last batch tile computes softmax on padding columns; harmless
    # because Pallas masks the out-of-bounds writeback (columns are independent).


def prepare_params(w1, b1, w2, b2, *, dtype=jnp.float32):
    """One-time parameter prep (NOT in the per-call hot path).  Weights keep their
    PyTorch [out, in] layout (no transpose needed for the batch-on-lanes compute);
    biases become column vectors so they broadcast over the lane (batch) dim.
    Optionally store weights/x stream in bf16 (biases stay f32)."""
    w1_p = jnp.asarray(w1).astype(dtype)                    # [H, D]
    w2_p = jnp.asarray(w2).astype(dtype)                    # [N, H]
    b1_2d = jnp.asarray(b1, jnp.float32).reshape(-1, 1)     # [H, 1]
    b2_2d = jnp.asarray(b2, jnp.float32).reshape(-1, 1)     # [N, 1]
    return w1_p, b1_2d, w2_p, b2_2d


def _round_up(x, m):
    return ((x + m - 1) // m) * m


def _pick_tile_b(batch):
    # The kernel is per-grid-step-overhead bound (~0.35 us/step) and the x stream is
    # tiny, so take big lane-dense batch tiles:
    #  * tile_b is the lane dim of the output block -> multiple of 128 (vreg lanes),
    #    preferring 256 (v6e/v7x MXU width) once tiles are big enough,
    #  * keep >=2 grid steps when possible so dimension_semantics=("parallel",) can
    #    shard batch tiles across v7x's 2 TensorCores,
    #  * cap at 2048 rows: a 2048x32 f32 x-tile is 256 KiB double-buffered — nowhere
    #    near the 32 MiB scoped VMEM budget on any of v5e/v6e/v7x.
    if batch <= 128:
        return batch                    # single block; block dims == array dims is legal
    per_core = pl.cdiv(batch, 2)
    if per_core <= 256:
        return _round_up(per_core, 128)
    return min(2048, _round_up(per_core, 256))


def selection_network(x, params, *, tile_b=None):
    """x: [B, D], params from prepare_params() -> softmax probs [B, N]."""
    w1, b1_2d, w2, b2_2d = params
    B, D = x.shape
    H = w1.shape[0]
    N = w2.shape[0]
    if tile_b is None:
        tile_b = _pick_tile_b(B)
    grid = (pl.cdiv(B, tile_b),)

    x_bytes = jnp.dtype(x.dtype).itemsize
    w_bytes = jnp.dtype(w1.dtype).itemsize
    cost = pl.CostEstimate(
        flops=2 * B * (D * H + H * N),
        transcendentals=B * N,
        bytes_accessed=B * D * x_bytes + B * N * 4
        + (D * H + H * N) * w_bytes + (H + N) * 4,
    )

    out_t = pl.pallas_call(
        selection_kernel,
        out_shape=jax.ShapeDtypeStruct((N, B), jnp.float32),
        grid=grid,
        in_specs=[
            # Only x is tiled over the batch grid; weights/biases use a constant
            # (0, 0) block index so Pallas keeps them VMEM-resident (never re-DMA'd).
            pl.BlockSpec((tile_b, D), lambda i: (i, 0)),
            pl.BlockSpec((H, D), lambda i: (0, 0)),
            pl.BlockSpec((H, 1), lambda i: (0, 0)),
            pl.BlockSpec((N, H), lambda i: (0, 0)),
            pl.BlockSpec((N, 1), lambda i: (0, 0)),
        ],
        # Lane-dense output store: the last block dim is tile_b (multiple of 128 or
        # the full batch), never the N=8 head dim -> unmasked vst.
        out_specs=pl.BlockSpec((N, tile_b), lambda i: (0, i)),
        compiler_params=pltpu.CompilerParams(
            dimension_semantics=("parallel",),     # shard batch tiles across v7x's 2 TCs
            vmem_limit_bytes=32 * 1024 * 1024,     # safe on v5e/v6e/v7x (64 MiB physical on v7x)
        ),
        cost_estimate=cost,
    )(x, w1, b1_2d, w2, b2_2d)
    # Tiny [N, B] -> [B, N] transpose outside the kernel to match the nn.Module output.
    return out_t.T


def xavier_normal(key, fan_out, fan_in):
    # matches nn.init.xavier_normal_ for a [fan_out, fan_in] Linear weight
    std = (2.0 / (fan_in + fan_out)) ** 0.5
    return std * jax.random.normal(key, (fan_out, fan_in), dtype=jnp.float32)


if __name__ == "__main__":
    # Module config: SelectionNetwork(input_dims=32, num=8) -> hidden_dim = 16.
    input_dims, num = 32, 8
    hidden_dim = input_dims // 2           # 16
    batch = 512                            # small demo; tile_b=256 -> 2 lane-dense grid steps

    key = jax.random.PRNGKey(0)
    k_x, k_w1, k_w2 = jax.random.split(key, 3)

    x = jax.random.normal(k_x, (batch, input_dims), dtype=jnp.float32)
    w1 = xavier_normal(k_w1, hidden_dim, input_dims)    # [H, D] (PyTorch layout)
    b1 = jnp.zeros((hidden_dim,), jnp.float32)
    w2 = xavier_normal(k_w2, num, hidden_dim)           # [N, H]
    b2 = jnp.zeros((num,), jnp.float32)

    HIGHEST = jax.lax.Precision.HIGHEST

    def reference(xv):
        # Pure-JAX reference (eval mode: dropout = identity), at HIGHEST precision so
        # XLA's default bf16 matmul pass on TPU does not pollute the ground truth.
        h = jnp.maximum(jnp.dot(xv, w1.T, precision=HIGHEST) + b1, 0.0)
        return jax.nn.softmax(jnp.dot(h, w2.T, precision=HIGHEST) + b2, axis=1)

    ref = reference(x)
    run = jax.jit(selection_network, static_argnames=("tile_b",))

    # Tolerance note: 2e-2 absorbs the worst-case difference between a default
    # (bf16-pass) matmul and a full-f32 matmul for either side; the row-sum checks
    # stay tight because softmax normalization is exact.
    # --- f32 storage path, explicit 2-step lane-dense grid ---
    params_f32 = prepare_params(w1, b1, w2, b2, dtype=jnp.float32)
    out_f32 = jax.block_until_ready(run(x, params_f32, tile_b=256))
    assert out_f32.shape == (batch, num)
    assert jnp.allclose(out_f32, ref, atol=2e-2, rtol=2e-2)
    assert jnp.allclose(jnp.sum(out_f32, axis=1), 1.0, atol=1e-3)

    # --- default tile selection path ---
    out_default = jax.block_until_ready(run(x, params_f32))
    assert jnp.allclose(out_default, ref, atol=2e-2, rtol=2e-2)
    assert jnp.allclose(jnp.sum(out_default, axis=1), 1.0, atol=1e-3)

    # --- bf16 storage path (halves HBM bytes of the x/weight streams; f32 accumulate) ---
    params_bf16 = prepare_params(w1, b1, w2, b2, dtype=jnp.bfloat16)
    out_bf16 = jax.block_until_ready(
        run(x.astype(jnp.bfloat16), params_bf16, tile_b=256))
    assert out_bf16.shape == (batch, num)
    assert jnp.allclose(out_bf16, ref, atol=3e-2, rtol=3e-2)
    assert jnp.allclose(jnp.sum(out_bf16, axis=1), 1.0, atol=5e-3)

    # --- degenerate tiny-batch path (single block; block dims == array dims) ---
    x_small = x[:8]
    out_small = jax.block_until_ready(run(x_small, params_f32))
    assert out_small.shape == (8, num)
    assert jnp.allclose(out_small, reference(x_small), atol=2e-2, rtol=2e-2)
    assert jnp.allclose(jnp.sum(out_small, axis=1), 1.0, atol=1e-3)

    print("KERNEL_OK")
</pallas_src>

<mosaic_0001>
module attributes {stable_mosaic.version = 11 : i64} {
  func.func @selection_kernel(%arg0: i32, %arg1: memref<256x32xf32, #tpu.memory_space<vmem>>, %arg2: memref<16x32xf32, #tpu.memory_space<vmem>>, %arg3: memref<16x1xf32, #tpu.memory_space<vmem>>, %arg4: memref<8x16xf32, #tpu.memory_space<vmem>>, %arg5: memref<8x1xf32, #tpu.memory_space<vmem>>, %arg6: memref<8x256xf32, #tpu.memory_space<vmem>>) attributes {dimension_semantics = [#tpu.dimension_semantics<parallel>], iteration_bounds = array<i64: 2>, scalar_prefetch = 0 : i64, scratch_operands = 0 : i64, tpu.core_type = #tpu.core_type<tc>, window_params = [{transform_indices = @transform_0, window_bounds = array<i64: 256, 32>}, {pipeline_mode = #tpu.pipeline_mode<synchronous>, transform_indices = @transform_1, window_bounds = array<i64: 16, 32>}, {pipeline_mode = #tpu.pipeline_mode<synchronous>, transform_indices = @transform_2, window_bounds = array<i64: 16, 1>}, {pipeline_mode = #tpu.pipeline_mode<synchronous>, transform_indices = @transform_3, window_bounds = array<i64: 8, 16>}, {pipeline_mode = #tpu.pipeline_mode<synchronous>, transform_indices = @transform_4, window_bounds = array<i64: 8, 1>}, {transform_indices = @transform_5, window_bounds = array<i64: 8, 256>}]} {
    %c0 = arith.constant 0 : index
    %c0_0 = arith.constant 0 : index
    %0 = vector.load %arg2[%c0, %c0_0] : memref<16x32xf32, #tpu.memory_space<vmem>>, vector<16x32xf32>
    %c0_1 = arith.constant 0 : index
    %c0_2 = arith.constant 0 : index
    %1 = vector.load %arg1[%c0_1, %c0_2] : memref<256x32xf32, #tpu.memory_space<vmem>>, vector<256x32xf32>
    %cst = arith.constant dense<0.000000e+00> : vector<16x256xf32>
    %2 = tpu.matmul %0, %1, %cst {dimension_numbers = #tpu.dot_dimension_numbers<[1], [1], [0], [0], [0, 0, 1, 0], [], []>} : vector<16x32xf32>, vector<256x32xf32>, vector<16x256xf32> -> vector<16x256xf32>
    %c0_3 = arith.constant 0 : index
    %c0_4 = arith.constant 0 : index
    %3 = vector.load %arg3[%c0_3, %c0_4] : memref<16x1xf32, #tpu.memory_space<vmem>>, vector<16x1xf32>
    %4 = vector.broadcast %3 : vector<16x1xf32> to vector<16x256xf32>
    %5 = arith.addf %2, %4 : vector<16x256xf32>
    %cst_5 = arith.constant 0.000000e+00 : f32
    %6 = vector.broadcast %cst_5 : f32 to vector<16x256xf32>
    %7 = arith.maximumf %5, %6 : vector<16x256xf32>
    %c0_6 = arith.constant 0 : index
    %c0_7 = arith.constant 0 : index
    %8 = vector.load %arg4[%c0_6, %c0_7] : memref<8x16xf32, #tpu.memory_space<vmem>>, vector<8x16xf32>
    %cst_8 = arith.constant dense<0.000000e+00> : vector<8x256xf32>
    %9 = tpu.matmul %8, %7, %cst_8 {dimension_numbers = #tpu.dot_dimension_numbers<[1], [0], [0], [1], [0, 0, 1, 1], [], []>} : vector<8x16xf32>, vector<16x256xf32>, vector<8x256xf32> -> vector<8x256xf32>
    %c0_9 = arith.constant 0 : index
    %c0_10 = arith.constant 0 : index
    %10 = vector.load %arg5[%c0_9, %c0_10] : memref<8x1xf32, #tpu.memory_space<vmem>>, vector<8x1xf32>
    %11 = vector.broadcast %10 : vector<8x1xf32> to vector<8x256xf32>
    %12 = arith.addf %9, %11 : vector<8x256xf32>
    %cst_11 = arith.constant dense<0xFF800000> : vector<256xf32>
    %13 = vector.multi_reduction <maximumf>, %12, %cst_11 [0] : vector<8x256xf32> to vector<256xf32>
    %14 = vector.shape_cast %13 : vector<256xf32> to vector<1x256xf32>
    %15 = vector.broadcast %14 : vector<1x256xf32> to vector<8x256xf32>
    %16 = arith.subf %12, %15 : vector<8x256xf32>
    %17 = math.exp %16 : vector<8x256xf32>
    %cst_12 = arith.constant dense<0.000000e+00> : vector<256xf32>
    %18 = vector.multi_reduction <add>, %17, %cst_12 [0] : vector<8x256xf32> to vector<256xf32>
    %19 = vector.shape_cast %18 : vector<256xf32> to vector<1x256xf32>
    %20 = vector.broadcast %19 : vector<1x256xf32> to vector<8x256xf32>
    %21 = arith.divf %17, %20 : vector<8x256xf32>
    %c0_13 = arith.constant 0 : index
    %c0_14 = arith.constant 0 : index
    %22 = vector.load %arg6[%c0_13, %c0_14] : memref<8x256xf32, #tpu.memory_space<vmem>>, vector<8x256xf32>
    tpu.vector_store %arg6[%c0_13, %c0_14], %21 {strides = array<i32>} : memref<8x256xf32, #tpu.memory_space<vmem>>, vector<8x256xf32>,
    return
  }
  func.func @transform_0(%arg0: i32) -> (i32, i32) {
    %c0_i32 = arith.constant 0 : i32
    %c0_i32_0 = arith.constant 0 : i32
    return %arg0, %c0_i32 : i32, i32
  }
  func.func @transform_1(%arg0: i32) -> (i32, i32) {
    %c0_i32 = arith.constant 0 : i32
    %c0_i32_0 = arith.constant 0 : i32
    %c0_i32_1 = arith.constant 0 : i32
    return %c0_i32, %c0_i32_0 : i32, i32
  }
  func.func @transform_2(%arg0: i32) -> (i32, i32) {
    %c0_i32 = arith.constant 0 : i32
    %c0_i32_0 = arith.constant 0 : i32
    %c0_i32_1 = arith.constant 0 : i32
    return %c0_i32, %c0_i32_0 : i32, i32
  }
  func.func @transform_3(%arg0: i32) -> (i32, i32) {
    %c0_i32 = arith.constant 0 : i32
    %c0_i32_0 = arith.constant 0 : i32
    %c0_i32_1 = arith.constant 0 : i32
    return %c0_i32, %c0_i32_0 : i32, i32
  }
  func.func @transform_4(%arg0: i32) -> (i32, i32) {
    %c0_i32 = arith.constant 0 : i32
    %c0_i32_0 = arith.constant 0 : i32
    %c0_i32_1 = arith.constant 0 : i32
    return %c0_i32, %c0_i32_0 : i32, i32
  }
  func.func @transform_5(%arg0: i32) -> (i32, i32) {
    %c0_i32 = arith.constant 0 : i32
    %c0_i32_0 = arith.constant 0 : i32
    return %c0_i32, %arg0 : i32, i32
  }
}

</mosaic_0001>

<llo_original>
// kernel: selection_network.1
$region0: #{selection_network.1}
  #allocation0 [shape = 'u32[]', space=smem, size = 0x4, offset = 0x4, fixed_abs, tag = 'smem constant byte address 0x4 - core index']
  #allocation1 [shape = 'u32[144,128]{1,0:T(1,128)}', space=vmem, size = 0x12000, scoped, tag = 'internal scratch']
  %s0 = inlined_call_operand.vmem [shape: f32[512,32], index: 0, kind: input, shape index: {}]
  %s1 = inlined_call_operand.vmem [shape: f32[16,32], index: 1, kind: input, shape index: {}]
  %s2 = inlined_call_operand.vmem [shape: f32[16,1], index: 2, kind: input, shape index: {}]
  %s3 = inlined_call_operand.vmem [shape: f32[8,16], index: 3, kind: input, shape index: {}]
  %s4 = inlined_call_operand.vmem [shape: f32[8,1], index: 4, kind: input, shape index: {}]
  %s5 = inlined_call_operand.hbm [shape: f32[8,512], index: 5, kind: output, shape index: {}]
  %s6 = sld [smem:[#allocation0]]
  $region53: #{selection_network.1} parent=0
    _
  %s8 = ssub.s32 1, %s6
  %s9 = scalar_select 0, %s8, %s6
  $region1: #{selection_network.1} parent=0
    #allocation2 [shape = 'u8[16384]{0}', space=vmem, size = 0x4000, scoped, tag = 'output window, operand 0']
    #allocation3 [shape = 's32[2]{0}', space=sflag, size = 0x8, scoped, tag = 'scoped memory for selection_network.1']
    %10 = vsyncpa [#allocation3], 0
    %s11 = scalar_lea.sflag [#allocation3], 1
    %12 = vsyncpa %s11, 0
    loop: start=0, step=1, limit=4
    $region2: #{selection_network.1} parent=1 // loop_pre_header
      _
    $region3: #{selection_network.1} parent=1 // loop_header
      %s14 = sphi 0, %s18
      %p15 = scmp.ge.s32.totalorder %s14, 4
      %s24 = sphi 0, %s26
      %s27 = sphi 0, %s24
      %s28 = sphi 0, %s27
      %s44 = sphi 0, %s28
      %s48 = sphi 0, %s48
      %s50 = sphi 0, %s48
      %s51 = sphi 0, %s50
      %s65 = sphi 0, %s51
      %s69 = sphi 0, %s69
      %s71 = sphi 0, %s69
      %s72 = sphi 0, %s71
      %s86 = sphi 0, %s72
      %s90 = sphi 0, %s90
      %s92 = sphi 0, %s90
      %s93 = sphi 0, %s92
      %s107 = sphi 0, %s93
      %s111 = sphi 0, %s111
      %s113 = sphi 0, %s111
      %s114 = sphi 0, %s113
      %s128 = sphi 0, %s114
      %s134 = sphi 0, %s136
      %s137 = sphi 0, %s134
      %s138 = sphi 0, %s137
      %s154 = sphi 0, %s138
    $region4: #{selection_network.1} parent=1 // loop_header_branch
      %17 = sbr.rel (%p15) target = $region8
    $region5: #{selection_network.1} parent=1 // loop_body
      %s19 = ssub.s32 %s14, 1
      %s20 = ssub.s32 %s14, 2
      %s21 = sadd.s32 %s14, 1
      %s22 = ssub.s32 %s14, %s21
      %p23 = scmp.eq.s32.totalorder %s22, 0
      %s25 = sadd.s32 %s24, 1
      %s26 = scalar_select %p23, %s24, %s25
      %p29 = pneg %p23
      %p30 = scmp.eq.s32.totalorder %s14, 1
      %p31 = por %p29, %p30
      %p32 = scmp.ne.s32.totalorder %s24, %s27
      %p33 = scmp.eq.s32.totalorder %s14, 0
      %p34 = por %p32, %p33
      %p35 = scmp.ne.s32.totalorder %s24, %s27
      %p36 = scmp.eq.s32.totalorder %s19, 1
      %p37 = por %p35, %p36
      %p38 = scmp.ne.s32.totalorder %s27, %s28
      %p39 = scmp.eq.s32.totalorder %s19, 0
      %p40 = por %p38, %p39
      %p41 = scmp.ne.s32.totalorder %s27, %s28
      %p42 = scmp.eq.s32.totalorder %s20, 1
      %p43 = por %p41, %p42
      %p45 = scmp.ne.s32.totalorder %s28, %s44
      %p46 = scmp.eq.s32.totalorder %s20, 0
      %p47 = por %p45, %p46
      %s49 = sadd.s32 %s48, 1
      %p52 = scmp.eq.s32.totalorder %s14, 1
      %p53 = scmp.ne.s32.totalorder %s48, %s50
      %p54 = scmp.eq.s32.totalorder %s14, 0
      %p55 = por %p53, %p54
      %p56 = scmp.ne.s32.totalorder %s48, %s50
      %p57 = scmp.eq.s32.totalorder %s19, 1
      %p58 = por %p56, %p57
      %p59 = scmp.ne.s32.totalorder %s50, %s51
      %p60 = scmp.eq.s32.totalorder %s19, 0
      %p61 = por %p59, %p60
      %p62 = scmp.ne.s32.totalorder %s50, %s51
      %p63 = scmp.eq.s32.totalorder %s20, 1
      %p64 = por %p62, %p63
      %p66 = scmp.ne.s32.totalorder %s51, %s65
      %p67 = scmp.eq.s32.totalorder %s20, 0
      %p68 = por %p66, %p67
      %s70 = sadd.s32 %s69, 1
      %p73 = scmp.eq.s32.totalorder %s14, 1
      %p74 = scmp.ne.s32.totalorder %s69, %s71
      %p75 = scmp.eq.s32.totalorder %s14, 0
      %p76 = por %p74, %p75
      %p77 = scmp.ne.s32.totalorder %s69, %s71
      %p78 = scmp.eq.s32.totalorder %s19, 1
      %p79 = por %p77, %p78
      %p80 = scmp.ne.s32.totalorder %s71, %s72
      %p81 = scmp.eq.s32.totalorder %s19, 0
      %p82 = por %p80, %p81
      %p83 = scmp.ne.s32.totalorder %s71, %s72
      %p84 = scmp.eq.s32.totalorder %s20, 1
      %p85 = por %p83, %p84
      %p87 = scmp.ne.s32.totalorder %s72, %s86
      %p88 = scmp.eq.s32.totalorder %s20, 0
      %p89 = por %p87, %p88
      %s91 = sadd.s32 %s90, 1
      %p94 = scmp.eq.s32.totalorder %s14, 1
      %p95 = scmp.ne.s32.totalorder %s90, %s92
      %p96 = scmp.eq.s32.totalorder %s14, 0
      %p97 = por %p95, %p96
      %p98 = scmp.ne.s32.totalorder %s90, %s92
      %p99 = scmp.eq.s32.totalorder %s19, 1
      %p100 = por %p98, %p99
      %p101 = scmp.ne.s32.totalorder %s92, %s93
      %p102 = scmp.eq.s32.totalorder %s19, 0
      %p103 = por %p101, %p102
      %p104 = scmp.ne.s32.totalorder %s92, %s93
      %p105 = scmp.eq.s32.totalorder %s20, 1
      %p106 = por %p104, %p105
      %p108 = scmp.ne.s32.totalorder %s93, %s107
      %p109 = scmp.eq.s32.totalorder %s20, 0
      %p110 = por %p108, %p109
      %s112 = sadd.s32 %s111, 1
      %p115 = scmp.eq.s32.totalorder %s14, 1
      %p116 = scmp.ne.s32.totalorder %s111, %s113
      %p117 = scmp.eq.s32.totalorder %s14, 0
      %p118 = por %p116, %p117
      %p119 = scmp.ne.s32.totalorder %s111, %s113
      %p120 = scmp.eq.s32.totalorder %s19, 1
      %p121 = por %p119, %p120
      %p122 = scmp.ne.s32.totalorder %s113, %s114
      %p123 = scmp.eq.s32.totalorder %s19, 0
      %p124 = por %p122, %p123
      %p125 = scmp.ne.s32.totalorder %s113, %s114
      %p126 = scmp.eq.s32.totalorder %s20, 1
      %p127 = por %p125, %p126
      %p129 = scmp.ne.s32.totalorder %s114, %s128
      %p130 = scmp.eq.s32.totalorder %s20, 0
      %p131 = por %p129, %p130
      %s132 = ssub.s32 %s14, %s21
      %p133 = scmp.eq.s32.totalorder %s132, 0
      %s135 = sadd.s32 %s134, 1
      %s136 = scalar_select %p133, %s134, %s135
      %p139 = pneg %p133
      %p140 = scmp.eq.s32.totalorder %s14, 1
      %p141 = por %p139, %p140
      %p142 = scmp.ne.s32.totalorder %s134, %s137
      %p143 = scmp.eq.s32.totalorder %s14, 0
      %p144 = por %p142, %p143
      %p145 = scmp.ne.s32.totalorder %s134, %s137
      %p146 = scmp.eq.s32.totalorder %s19, 1
      %p147 = por %p145, %p146
      %p148 = scmp.ne.s32.totalorder %s137, %s138
      %p149 = scmp.eq.s32.totalorder %s19, 0
      %p150 = por %p148, %p149
      %p151 = scmp.ne.s32.totalorder %s137, %s138
      %p152 = scmp.eq.s32.totalorder %s20, 1
      %p153 = por %p151, %p152
      %p155 = scmp.ne.s32.totalorder %s138, %s154
      %p156 = scmp.eq.s32.totalorder %s20, 0
      %p157 = por %p155, %p156
      %p158 = scmp.le.s32.totalorder 1, %s14
      %p159 = scmp.lt.s32.totalorder %s14, 3
      %p160 = pnand %p158, %p159
      %p161 = pneg %p160
      // Predicated region
      $region9: #{selection_network.1} parent=5 // pred_check
        _
      $region10: #{selection_network.1} parent=5 // pred_check_branch
        %163 = sbr.rel (%p160) target = $region12
      $region11: #{selection_network.1} parent=5 // pred_region
        %s164 = ssub.s32 %s14, 1
        // Predicated region
        $region13: #{selection_network.1} parent=11 // pred_check
          %p165 = pneg %p61
        $region14: #{selection_network.1} parent=11 // pred_check_branch
          %167 = sbr.rel (%p165) target = $region16
        $region15: #{selection_network.1} parent=11 // pred_region
          _
        $region16: #{selection_network.1} parent=11 // pred_fallthru
          _
        // Predicated region
        $region17: #{selection_network.1} parent=11 // pred_check
          %p168 = pneg %p82
        $region18: #{selection_network.1} parent=11 // pred_check_branch
          %170 = sbr.rel (%p168) target = $region20
        $region19: #{selection_network.1} parent=11 // pred_region
          _
        $region20: #{selection_network.1} parent=11 // pred_fallthru
          _
        // Predicated region
        $region21: #{selection_network.1} parent=11 // pred_check
          %p171 = pneg %p103
        $region22: #{selection_network.1} parent=11 // pred_check_branch
          %173 = sbr.rel (%p171) target = $region24
        $region23: #{selection_network.1} parent=11 // pred_region
          _
        $region24: #{selection_network.1} parent=11 // pred_fallthru
          _
        // Predicated region
        $region25: #{selection_network.1} parent=11 // pred_check
          %p174 = pneg %p124
        $region26: #{selection_network.1} parent=11 // pred_check_branch
          %176 = sbr.rel (%p174) target = $region28
        $region27: #{selection_network.1} parent=11 // pred_region
          _
        $region28: #{selection_network.1} parent=11 // pred_fallthru
          _
      $region12: #{selection_network.1} parent=5 // pred_fallthru
        _
      %p177 = scmp.lt.s32.totalorder %s14, 2
      // Predicated region
      $region29: #{selection_network.1} parent=5 // pred_check
        %p178 = pneg %p177
      $region30: #{selection_network.1} parent=5 // pred_check_branch
        %180 = sbr.rel (%p178) target = $region32
      $region31: #{selection_network.1} parent=5 // pred_region
        // Predicated region
        $region33: #{selection_network.1} parent=31 // pred_check
          %p181 = pneg %p34
        $region34: #{selection_network.1} parent=31 // pred_check_branch
          %183 = sbr.rel (%p181) target = $region36
        $region35: #{selection_network.1} parent=31 // pred_region
          %s184 = smul.u32 32, %s14
          %p185 = scmp.lt.s32.totalorder %s184, 63
          %s186 = scalar_select %p185, %s184, 63
          %s187 = smul.addr %s186, 8
          %s188 = scalar_lea.vmem %s0, %s187
          %s189 = smul.u32 32, %s14
        $region36: #{selection_network.1} parent=31 // pred_fallthru
          _
      $region32: #{selection_network.1} parent=5 // pred_fallthru
        _
      %p190 = scmp.le.s32.totalorder 1, %s14
      %p191 = scmp.lt.s32.totalorder %s14, 3
      %p192 = pnand %p190, %p191
      %p193 = pneg %p192
      // Predicated region
      $region37: #{selection_network.1} parent=5 // pred_check
        _
      $region38: #{selection_network.1} parent=5 // pred_check_branch
        %195 = sbr.rel (%p192) target = $region40
      $region39: #{selection_network.1} parent=5 // pred_region
        %s196 = ssub.s32 %s14, 1
        %s197 = smul.u32 32, %s19
        %p198 = scmp.lt.s32.totalorder %s197, 63
        %s199 = scalar_select %p198, %s197, 63
        %s200 = smul.addr %s199, 8
        %s201 = scalar_lea.vmem %s0, %s200
        %p202 = pneg %p40
        %p203 = pneg %p37
        %p204 = pneg %p61
        %p205 = pneg %p58
        %p206 = pneg %p82
        %p207 = pneg %p79
        %p208 = pneg %p103
        %p209 = pneg %p100
        %p210 = pneg %p124
        %p211 = pneg %p121
        %p212 = pneg %p150
        %p213 = pneg %p147
        %s214 = sand.u32 %s137, 1
        %s215 = scalar_lea.sflag [#allocation3], %s214
        %s216 = sand.u32 %s137, 1
        %s217 = smul.addr %s216, 16
        %s218 = scalar_lea.vmem [#allocation2], %s217
        %s219 = smul.u32 32, %s19
        %p220 = scmp.lt.s32.totalorder %s219, 63
        %s221 = scalar_select %p220, %s219, 63
        %s222 = smul.addr %s221, 8
        %s223 = scalar_lea.vmem %s0, %s222
        %s224 = smul.u32 32, %s19
        %s225 = smul.u32 2, %s19
        %v226 = vld [vmem:[%s1] sm:$0xff]
        %v227 = vld [vmem:[%s1 + $0x8] sm:$0xff]
        %v228 = vld [vmem:[%s223] sm:$0xff]
        %v229 = vld [vmem:[%s223 + $0x8] sm:$0xff]
        %v230 = vld [vmem:[%s223 + $0x10] sm:$0xff]
        %v231 = vld [vmem:[%s223 + $0x18] sm:$0xff]
        %v232 = vld [vmem:[%s223 + $0x20] sm:$0xff]
        %v233 = vld [vmem:[%s223 + $0x28] sm:$0xff]
        %v234 = vld [vmem:[%s223 + $0x30] sm:$0xff]
        %v235 = vld [vmem:[%s223 + $0x38] sm:$0xff]
        %v236 = vld [vmem:[%s223 + $0x40] sm:$0xff]
        %v237 = vld [vmem:[%s223 + $0x48] sm:$0xff]
        %v238 = vld [vmem:[%s223 + $0x50] sm:$0xff]
        %v239 = vld [vmem:[%s223 + $0x58] sm:$0xff]
        %v240 = vld [vmem:[%s223 + $0x60] sm:$0xff]
        %v241 = vld [vmem:[%s223 + $0x68] sm:$0xff]
        %v242 = vld [vmem:[%s223 + $0x70] sm:$0xff]
        %v243 = vld [vmem:[%s223 + $0x78] sm:$0xff]
        %v244 = vld [vmem:[%s223 + $0x80] sm:$0xff]
        %v245 = vld [vmem:[%s223 + $0x88] sm:$0xff]
        %v246 = vld [vmem:[%s223 + $0x90] sm:$0xff]
        %v247 = vld [vmem:[%s223 + $0x98] sm:$0xff]
        %v248 = vld [vmem:[%s223 + $0xa0] sm:$0xff]
        %v249 = vld [vmem:[%s223 + $0xa8] sm:$0xff]
        %v250 = vld [vmem:[%s223 + $0xb0] sm:$0xff]
        %v251 = vld [vmem:[%s223 + $0xb8] sm:$0xff]
        %v252 = vld [vmem:[%s223 + $0xc0] sm:$0xff]
        %v253 = vld [vmem:[%s223 + $0xc8] sm:$0xff]
        %v254 = vld [vmem:[%s223 + $0xd0] sm:$0xff]
        %v255 = vld [vmem:[%s223 + $0xd8] sm:$0xff]
        %v256 = vld [vmem:[%s223 + $0xe0] sm:$0xff]
        %v257 = vld [vmem:[%s223 + $0xe8] sm:$0xff]
        %v258 = vld [vmem:[%s223 + $0xf0] sm:$0xff]
        %v259 = vld [vmem:[%s223 + $0xf8] sm:$0xff]
        %v260 = vld [vmem:[%s2] sm:$0xff]
        %v261 = vld [vmem:[%s2 + $0x8] sm:$0xff]
        %263 = vset.pattern.permute.xlu0 0
        %264 = vperm.xlu0 %263, %v260
        %v265 = vpop.permute.xlu0 %264
        %268 = vset.pattern.permute.xlu0 0
        %269 = vperm.xlu0 %268, %v261
        %v270 = vpop.permute.xlu0 %269
        %vm272 = vcmask 261120
        %v274 = vsel %vm272, %v226, 0
        %v277 = vsel %vm272, %v227, 0
        %v280 = vsel %vm272, %v228, 0
        %v283 = vsel %vm272, %v229, 0
        %v286 = vsel %vm272, %v230, 0
        %v289 = vsel %vm272, %v231, 0
        %v292 = vsel %vm272, %v232, 0
        %v295 = vsel %vm272, %v233, 0
        %v298 = vsel %vm272, %v234, 0
        %v301 = vsel %vm272, %v235, 0
        %v304 = vsel %vm272, %v236, 0
        %v307 = vsel %vm272, %v237, 0
        %v310 = vsel %vm272, %v238, 0
        %v313 = vsel %vm272, %v239, 0
        %v316 = vsel %vm272, %v240, 0
        %v319 = vsel %vm272, %v241, 0
        %v322 = vsel %vm272, %v242, 0
        %v325 = vsel %vm272, %v243, 0
        %v328 = vsel %vm272, %v244, 0
        %v331 = vsel %vm272, %v245, 0
        %v334 = vsel %vm272, %v246, 0
        %v337 = vsel %vm272, %v247, 0
        %v340 = vsel %vm272, %v248, 0
        %v343 = vsel %vm272, %v249, 0
        %v346 = vsel %vm272, %v250, 0
        %v349 = vsel %vm272, %v251, 0
        %v352 = vsel %vm272, %v252, 0
        %v355 = vsel %vm272, %v253, 0
        %v358 = vsel %vm272, %v254, 0
        %v361 = vsel %vm272, %v255, 0
        %v364 = vsel %vm272, %v256, 0
        %v367 = vsel %vm272, %v257, 0
        %v370 = vsel %vm272, %v258, 0
        %v373 = vsel %vm272, %v259, 0
        %375 = vmatprep.subr.mxu0 0.0
        %376 = vmatpush1.xpose.msra.mxu0 %v280
        %377 = vmatprep.subr.mxu0 0.0
        %378 = vmatpush1.xpose.msra.mxu0 %v283
        %379 = vmatprep.subr.mxu0 0.0
        %380 = vmatpush1.xpose.msra.mxu0 %v286
        %381 = vmatprep.subr.mxu0 0.0
        %382 = vmatpush1.xpose.msra.mxu0 %v289
        %383 = vmatprep.subr.mxu0 0.0
        %384 = vmatpush1.xpose.msra.mxu0 %v292
        %385 = vmatprep.subr.mxu0 0.0
        %386 = vmatpush1.xpose.msra.mxu0 %v295
        %387 = vmatprep.subr.mxu0 0.0
        %388 = vmatpush1.xpose.msra.mxu0 %v298
        %389 = vmatprep.subr.mxu0 0.0
        %390 = vmatpush1.xpose.msra.mxu0 %v301
        %391 = vmatprep.subr.mxu0 0.0
        %392 = vmatpush1.xpose.msra.mxu0 %v304
        %393 = vmatprep.subr.mxu0 0.0
        %394 = vmatpush1.xpose.msra.mxu0 %v307
        %395 = vmatprep.subr.mxu0 0.0
        %396 = vmatpush1.xpose.msra.mxu0 %v310
        %397 = vmatprep.subr.mxu0 0.0
        %398 = vmatpush1.xpose.msra.mxu0 %v313
        %399 = vmatprep.subr.mxu0 0.0
        %400 = vmatpush1.xpose.msra.mxu0 %v316
        %401 = vmatprep.subr.mxu0 0.0
        %402 = vmatpush1.xpose.msra.mxu0 %v319
        %403 = vmatprep.subr.mxu0 0.0
        %404 = vmatpush1.xpose.msra.mxu0 %v322
        %405 = vmatprep.subr.mxu0 0.0
        %406 = vmatpush1.xpose.msra.mxu0 %v325
        %407 = vmatprep.subr.mxu0 0.0
        %408 = vmatpush1.xpose.msra.mxu0 %v328
        %409 = vmatprep.subr.mxu0 0.0
        %410 = vmatpush1.xpose.msra.mxu0 %v331
        %411 = vmatprep.subr.mxu0 0.0
        %412 = vmatpush1.xpose.msra.mxu0 %v334
        %413 = vmatprep.subr.mxu0 0.0
        %414 = vmatpush1.xpose.msra.mxu0 %v337
        %415 = vmatprep.subr.mxu0 0.0
        %416 = vmatpush1.xpose.msra.mxu0 %v340
        %417 = vmatprep.subr.mxu0 0.0
        %418 = vmatpush1.xpose.msra.mxu0 %v343
        %419 = vmatprep.subr.mxu0 0.0
        %420 = vmatpush1.xpose.msra.mxu0 %v346
        %421 = vmatprep.subr.mxu0 0.0
        %422 = vmatpush1.xpose.msra.mxu0 %v349
        %423 = vmatprep.subr.mxu0 0.0
        %424 = vmatpush1.xpose.msra.mxu0 %v352
        %425 = vmatprep.subr.mxu0 0.0
        %426 = vmatpush1.xpose.msra.mxu0 %v355
        %427 = vmatprep.subr.mxu0 0.0
        %428 = vmatpush1.xpose.msra.mxu0 %v358
        %429 = vmatprep.subr.mxu0 0.0
        %430 = vmatpush1.xpose.msra.mxu0 %v361
        %431 = vmatprep.subr.mxu0 0.0
        %432 = vmatpush1.xpose.msra.mxu0 %v364
        %433 = vmatprep.subr.mxu0 0.0
        %434 = vmatpush1.xpose.msra.mxu0 %v367
        %435 = vmatprep.subr.mxu0 0.0
        %436 = vmatpush1.xpose.msra.mxu0 %v370
        %437 = vmatprep.subr.mxu0 0.0
        %438 = vmatpush1.xpose.msra.mxu0 %v373
        %439 = vmatprep.mubr.f32.mxu0 0.0
        %440 = vmatmul.mubr.f32.gmra.mrb[0].mxu0 %v274
        %v441 = vpop.f32.mrb[0].mxu0
        %v442 = vadd.f32 %v265, %v441
        %v443 = vpop.f32.mrb[0].mxu0
        %v444 = vadd.f32 %v265, %v443
        %445 = vmatprep.mubr.f32.mxu0 0.0
        %446 = vmatmul.mubr.f32.gmra.mrb[0].mxu0 %v277
        %v447 = vpop.f32.mrb[0].mxu0
        %v448 = vadd.f32 %v270, %v447
        %v449 = vpop.f32.mrb[0].mxu0
        %v450 = vadd.f32 %v270, %v449
        %451 = vdwg.mxu0
        %v452 = vmax.f32 %v442, 0.0
        %v453 = vmax.f32 %v444, 0.0
        %v454 = vmax.f32 %v448, 0.0
        %v455 = vmax.f32 %v450, 0.0
        %v456 = vld [vmem:[%s3] sm:$0xff]
        %v457 = vld [vmem:[%s4] sm:$0xff]
        %459 = vset.pattern.permute.xlu0 0
        %460 = vperm.xlu0 %459, %v457
        %v461 = vpop.permute.xlu0 %460
        %vm463 = vcmask 130048
        %v465 = vsel %vm463, %v456, 0
        %467 = vmatprep.subr.mxu0 %v453
        %468 = vmatpush1.msra.mxu0 %v452
        %469 = vmatprep.subr.mxu0 %v455
        %470 = vmatpush1.msra.mxu0 %v454
        %471 = vmatprep.subr.mxu0 0.0
        %472 = vmatpush1.msra.mxu0 0.0
        %473 = vmatprep.subr.mxu0 0.0
        %474 = vmatpush1.msra.mxu0 0.0
        %475 = vmatprep.subr.mxu0 0.0
        %476 = vmatpush1.msra.mxu0 0.0
        %477 = vmatprep.subr.mxu0 0.0
        %478 = vmatpush1.msra.mxu0 0.0
        %479 = vmatprep.subr.mxu0 0.0
        %480 = vmatpush1.msra.mxu0 0.0
        %481 = vmatprep.subr.mxu0 0.0
        %482 = vmatpush1.msra.mxu0 0.0
        %483 = vmatprep.subr.mxu0 0.0
        %484 = vmatpush1.msra.mxu0 0.0
        %485 = vmatprep.subr.mxu0 0.0
        %486 = vmatpush1.msra.mxu0 0.0
        %487 = vmatprep.subr.mxu0 0.0
        %488 = vmatpush1.msra.mxu0 0.0
        %489 = vmatprep.subr.mxu0 0.0
        %490 = vmatpush1.msra.mxu0 0.0
        %491 = vmatprep.subr.mxu0 0.0
        %492 = vmatpush1.msra.mxu0 0.0
        %493 = vmatprep.subr.mxu0 0.0
        %494 = vmatpush1.msra.mxu0 0.0
        %495 = vmatprep.subr.mxu0 0.0
        %496 = vmatpush1.msra.mxu0 0.0
        %497 = vmatprep.subr.mxu0 0.0
        %498 = vmatpush1.msra.mxu0 0.0
        %499 = vmatprep.subr.mxu0 0.0
        %500 = vmatpush1.msra.mxu0 0.0
        %501 = vmatprep.subr.mxu0 0.0
        %502 = vmatpush1.msra.mxu0 0.0
        %503 = vmatprep.subr.mxu0 0.0
        %504 = vmatpush1.msra.mxu0 0.0
        %505 = vmatprep.subr.mxu0 0.0
        %506 = vmatpush1.msra.mxu0 0.0
        %507 = vmatprep.subr.mxu0 0.0
        %508 = vmatpush1.msra.mxu0 0.0
        %509 = vmatprep.subr.mxu0 0.0
        %510 = vmatpush1.msra.mxu0 0.0
        %511 = vmatprep.subr.mxu0 0.0
        %512 = vmatpush1.msra.mxu0 0.0
        %513 = vmatprep.subr.mxu0 0.0
        %514 = vmatpush1.msra.mxu0 0.0
        %515 = vmatprep.subr.mxu0 0.0
        %516 = vmatpush1.msra.mxu0 0.0
        %517 = vmatprep.subr.mxu0 0.0
        %518 = vmatpush1.msra.mxu0 0.0
        %519 = vmatprep.subr.mxu0 0.0
        %520 = vmatpush1.msra.mxu0 0.0
        %521 = vmatprep.subr.mxu0 0.0
        %522 = vmatpush1.msra.mxu0 0.0
        %523 = vmatprep.subr.mxu0 0.0
        %524 = vmatpush1.msra.mxu0 0.0
        %525 = vmatprep.subr.mxu0 0.0
        %526 = vmatpush1.msra.mxu0 0.0
        %527 = vmatprep.subr.mxu0 0.0
        %528 = vmatpush1.msra.mxu0 0.0
        %529 = vmatprep.subr.mxu0 0.0
        %530 = vmatpush1.msra.mxu0 0.0
        %531 = vmatprep.mubr.f32.mxu0 0.0
        %532 = vmatmul.mubr.f32.gmra.mrb[0].mxu0 %v465
        %v533 = vpop.f32.mrb[0].mxu0
        %v534 = vadd.f32 %v461, %v533
        %v535 = vpop.f32.mrb[0].mxu0
        %v536 = vadd.f32 %v461, %v535
        %537 = vdwg.mxu0
        %v538 = vrot.slane %v534, 4
        %v539 = vmax.f32 %v534, %v538
        %v540 = vrot.slane %v539, 2
        %v541 = vmax.f32 %v539, %v540
        %v542 = vrot.slane %v541, 1
        %v543 = vmax.f32 %v541, %v542
        %v544 = vrot.slane %v536, 4
        %v545 = vmax.f32 %v536, %v544
        %v546 = vrot.slane %v545, 2
        %v547 = vmax.f32 %v545, %v546
        %v548 = vrot.slane %v547, 1
        %v549 = vmax.f32 %v547, %v548
        %v550 = vsub.f32 %v534, %v543
        %v551 = vsub.f32 %v536, %v549
        %v552 = vmul.f32 %v550, 1.442695
        %v553 = vpow.pop %v552
        %v554 = vmul.f32 %v551, 1.442695
        %v555 = vpow.pop %v554
        %v556 = vrot.slane %v553, 4
        %v557 = vadd.f32 %v553, %v556
        %v558 = vrot.slane %v557, 2
        %v559 = vadd.f32 %v557, %v558
        %v560 = vrot.slane %v559, 1
        %v561 = vadd.f32 %v559, %v560
        %v562 = vrot.slane %v555, 4
        %v563 = vadd.f32 %v555, %v562
        %v564 = vrot.slane %v563, 2
        %v565 = vadd.f32 %v563, %v564
        %v566 = vrot.slane %v565, 1
        %v567 = vadd.f32 %v565, %v566
        %v568 = vrcp.pop %v561
        %v569 = vmul.f32 %v553, %v568
        %v570 = vrcp.pop %v567
        %v571 = vmul.f32 %v555, %v570
        %572 = vst [vmem:[%s218] sm:$0xff] %v569
        %573 = vst [vmem:[%s218 + $0x8] sm:$0xff] %v571
        %s574 = sand.u32 %s137, 1
        %s575 = scalar_lea.sflag [#allocation3], %s574
        %s576 = sand.u32 %s137, 1
        %s577 = smul.addr %s576, 16
        %s578 = scalar_lea.vmem [#allocation2], %s577
        // Predicated region
        $region41: #{selection_network.1} parent=39 // pred_check
          %p579 = pneg %p147
        $region42: #{selection_network.1} parent=39 // pred_check_branch
          %581 = sbr.rel (%p579) target = $region44
        $region43: #{selection_network.1} parent=39 // pred_region
          %s582 = smul.u32 2, %s19
          %s584 = ssub.s32 256, 256
          %585 = vsyncadd %s575, %s584
          %s586 = smul.addr %s582, 128
          %s587 = scalar_lea.hbm %s5, %s586
          %s589 = sshll.u32 %s578, 4
          %s590 = int_to_ptr.vmem [resolvable:$true] %s589
          %592 = dma.vmem_to_hbm [thread:$0]  %s590, 256, %s587, %s575
        $region44: #{selection_network.1} parent=39 // pred_fallthru
          _
      $region40: #{selection_network.1} parent=5 // pred_fallthru
        _
      %p593 = scmp.le.s32.totalorder 2, %s14
      // Predicated region
      $region45: #{selection_network.1} parent=5 // pred_check
        %p594 = pneg %p593
      $region46: #{selection_network.1} parent=5 // pred_check_branch
        %596 = sbr.rel (%p594) target = $region48
      $region47: #{selection_network.1} parent=5 // pred_region
        %s597 = ssub.s32 %s14, 2
        // Predicated region
        $region49: #{selection_network.1} parent=47 // pred_check
          %p598 = pneg %p153
        $region50: #{selection_network.1} parent=47 // pred_check_branch
          %600 = sbr.rel (%p598) target = $region52
        $region51: #{selection_network.1} parent=47 // pred_region
          %s601 = sand.u32 %s138, 1
          %s602 = scalar_lea.sflag [#allocation3], %s601
          %s603 = sand.u32 %s138, 1
          %s604 = smul.addr %s603, 16
          %s605 = scalar_lea.vmem [#allocation2], %s604
          %606 = dma.done %s602, 256
        $region52: #{selection_network.1} parent=47 // pred_fallthru
          _
      $region48: #{selection_network.1} parent=5 // pred_fallthru
        _
    $region6: #{selection_network.1} parent=1 // loop_footer
      %s18 = sadd.s32 1, %s14
    $region7: #{selection_network.1} parent=1 // loop_footer_branch
      %13 = sbr.rel target = $region3
    $region8: #{selection_network.1} parent=1 // loop_exit
      _
    %607 = vsyncpa [#allocation3], 1
    %s608 = scalar_lea.sflag [#allocation3], 1
    %609 = vsyncpa %s608, 1

</llo_original>
